<compile_context>
chip_gen: v5e
topology: v5e:2x2
jax: 0.10.0
libtpu: 0.0.40
codegen_flags: <defaults>
</compile_context>

<pallas_src>
import math

import jax
import jax.numpy as jnp
from jax.experimental import pallas as pl
from jax.experimental.pallas import tpu as pltpu


def piconv_kernel(x_ref, wd_ref, wp_ref, g_ref, m_ref, wu_ref,
                  aa_a_ref, aa_b_ref, o_ref):
    """One lane-dense batch tile per grid step.

    x_ref : (C_aug, L)  columns are (batch, k) pairs; row C is ones (carries
                        the folded before-affine beta), rows beyond are zero.
    wd_ref: (M, C_aug)  down conv with before-affine folded in.
    wp_ref: (M*K, M)    per_inv conv.
    g_ref : (L, L)      block-diagonal ones: lane group-sum over k2.
    m_ref : (M*K, L)    mask keeping entries where row-k1 == lane-k1.
    wu_ref: (C, M*K)    up conv expanded over k1, with the 1/k scale folded in.
    aa_*  : (C, 1)      after-affine scale/shift (broadcast over lanes).
    """
    x = x_ref[...]
    # down (+ before affine) -> ReLU                            (M, L)
    h = jnp.maximum(
        jnp.dot(wd_ref[...], x, preferred_element_type=jnp.float32), 0.0)
    # per_inv -> ReLU                                           (M*K, L)
    z = jnp.maximum(
        jnp.dot(wp_ref[...], h, preferred_element_type=jnp.float32), 0.0)
    # reshape(b, M, K, K).sum(-1), lane-dense:
    #   group-sum over k2 inside each fused-batch lane group ...
    zg = jnp.dot(z, g_ref[...], preferred_element_type=jnp.float32)
    #   ... then keep only the entry whose row-k1 matches the lane-k1.
    t = zg * m_ref[...]
    # up (with 1/k folded in) -> ReLU                           (C, L)
    u = jnp.maximum(
        jnp.dot(wu_ref[...], t, preferred_element_type=jnp.float32), 0.0)
    # after affine (per-channel, broadcast across lanes)
    o_ref[...] = (u * aa_a_ref[...] + aa_b_ref[...]).astype(o_ref.dtype)


def piconv(x, params, *, reduction, scale=True):
    b, c, k = x.shape
    assert reduction > 1, "kernel implements the reduction>1 branch of PIConv"
    mid = c // reduction
    neighbors = params["w_per"].shape[0] // mid
    # The module's reshape([b, c, k, k]) silently requires neighbors == k.
    assert neighbors == k, (neighbors, k)

    # --- batch tile: make the lane axis wide (>=256 targets v6e/v7x MXU) while
    #     staying legal (lane block = multiple of 128, or the full axis). ---
    if b * k <= 512:
        bt = b                                   # whole batch in one grid step
    else:
        g128 = 128 // math.gcd(k, 128)
        bt = g128 * max(1, 256 // (g128 * k))
    bp = ((b + bt - 1) // bt) * bt               # pad batch to a multiple of bt
    l = bt * k

    f32 = jnp.float32

    # --- host-side layout + constant folding (plain XLA ops, outside kernel) --
    x_l = jnp.transpose(x, (1, 0, 2)).reshape(c, b * k).astype(f32)
    if bp != b:
        x_l = jnp.pad(x_l, ((0, 0), (0, (bp - b) * k)))
    c_aug = ((c + 1 + 7) // 8) * 8               # 8-aligned augmented channels
    x_aug = jnp.concatenate([x_l, jnp.ones((1, bp * k), f32)], axis=0)
    x_aug = jnp.pad(x_aug, ((0, c_aug - (c + 1)), (0, 0)))

    ba_alpha = params["ba_alpha"].reshape(c).astype(f32)
    ba_beta = params["ba_beta"].reshape(c).astype(f32)
    w_down = params["w_down"].astype(f32)
    w_per = params["w_per"].astype(f32)
    w_up = params["w_up"].astype(f32)

    # relu(Wd (a*x + b)) == relu([Wd*a | Wd@b | 0] @ [x; 1; 0])
    w_down_aug = jnp.concatenate(
        [w_down * ba_alpha[None, :], (w_down @ ba_beta)[:, None]], axis=1)
    w_down_aug = jnp.pad(w_down_aug, ((0, 0), (0, c_aug - (c + 1))))

    inv_scale = (1.0 / k) if scale else 1.0
    # up conv expanded over k1 (column m*k + k1 carries w_up[:, m]) + 1/k scale.
    w_up_exp = jnp.repeat(w_up * inv_scale, k, axis=1)          # (C, M*K)

    col = jnp.arange(l)
    g_mat = (col[:, None] // k == col[None, :] // k).astype(f32)     # (L, L)
    row = jnp.arange(mid * k)
    m_mask = ((row[:, None] % k) == (col[None, :] % k)).astype(f32)  # (M*K, L)

    aa_alpha = params["aa_alpha"].reshape(c, 1).astype(f32)
    aa_beta = params["aa_beta"].reshape(c, 1).astype(f32)

    const = lambda shp: pl.BlockSpec(shp, lambda i: (0, 0))

    out_lane = pl.pallas_call(
        piconv_kernel,
        out_shape=jax.ShapeDtypeStruct((c, bp * k), x.dtype),
        grid_spec=pltpu.PrefetchScalarGridSpec(
            num_scalar_prefetch=0,
            grid=(bp // bt,),
            in_specs=[
                pl.BlockSpec((c_aug, l), lambda i: (0, i)),  # x, lane-dense
                const((mid, c_aug)),                         # down (+affine)
                const((mid * k, mid)),                       # per_inv
                const((l, l)),                               # group-sum G
                const((mid * k, l)),                         # diag-pick mask M
                const((c, mid * k)),                         # up (+1/k)
                const((c, 1)),                               # after alpha
                const((c, 1)),                               # after beta
            ],
            out_specs=pl.BlockSpec((c, l), lambda i: (0, i)),
        ),
        compiler_params=pltpu.CompilerParams(
            dimension_semantics=("parallel",)),
    )(x_aug, w_down_aug, w_per, g_mat, m_mask, w_up_exp, aa_alpha, aa_beta)

    # back to the module's (B, C, K) layout
    return out_lane.reshape(c, bp, k)[:, :b, :].transpose(1, 0, 2)


def piconv_ref(x, p):
    """Pure-JAX reference mirroring the PyTorch forward."""
    y = x * p["ba_alpha"] + p["ba_beta"]
    h = jax.nn.relu(jnp.einsum("mc,bck->bmk", p["w_down"], y))
    z = jax.nn.relu(jnp.einsum("nm,bmk->bnk", p["w_per"], h))
    b, m, k = h.shape
    s = z.reshape(b, m, k, k).sum(-1) / k
    u = jax.nn.relu(jnp.einsum("cm,bmk->bck", p["w_up"], s))
    return u * p["aa_alpha"] + p["aa_beta"]


def xavier_normal(key, shape):
    # Conv1d(kernel=1) weight (out, in, 1): fan_in = in, fan_out = out.
    fan_out, fan_in = shape
    std = (2.0 / (fan_in + fan_out)) ** 0.5
    return std * jax.random.normal(key, shape, dtype=jnp.float32)


if __name__ == "__main__":
    B, C, K = 2, 32, 8           # batch, channels, sequence length (== neighbors)
    reduction = 4
    neighbors = K                # reshape([b,c,k,k]) requires neighbors == k
    mid = C // reduction

    key = jax.random.PRNGKey(0)
    k_x, k_d, k_p, k_u, k_a1, k_a2, k_b1, k_b2 = jax.random.split(key, 8)

    x = jax.random.normal(k_x, (B, C, K), dtype=jnp.float32)

    params = {
        # affine params are ones/zeros in __init__; perturb deterministically
        # to exercise the folding / broadcast paths.
        "ba_alpha": jnp.ones((1, C, 1), jnp.float32)
                    + 0.1 * jax.random.normal(k_a1, (1, C, 1), jnp.float32),
        "ba_beta": 0.1 * jax.random.normal(k_b1, (1, C, 1), jnp.float32),
        "aa_alpha": jnp.ones((1, C, 1), jnp.float32)
                    + 0.1 * jax.random.normal(k_a2, (1, C, 1), jnp.float32),
        "aa_beta": 0.1 * jax.random.normal(k_b2, (1, C, 1), jnp.float32),
        "w_down": xavier_normal(k_d, (mid, C)),
        "w_per": xavier_normal(k_p, (mid * neighbors, mid)),
        "w_up": xavier_normal(k_u, (C, mid)),
    }

    out = jax.block_until_ready(piconv(x, params, reduction=reduction))
    ref = jax.block_until_ready(piconv_ref(x, params))

    assert out.shape == (B, C, K), out.shape
    max_err = float(jnp.max(jnp.abs(out - ref)))
    assert jnp.allclose(out, ref, atol=5e-3, rtol=5e-3), max_err
    print("KERNEL_OK")
</pallas_src>

<mosaic_0001>
module attributes {stable_mosaic.version = 11 : i64} {
  func.func @piconv_kernel(%arg0: i32, %arg1: memref<40x16xf32, #tpu.memory_space<vmem>>, %arg2: memref<8x40xf32, #tpu.memory_space<vmem>>, %arg3: memref<64x8xf32, #tpu.memory_space<vmem>>, %arg4: memref<16x16xf32, #tpu.memory_space<vmem>>, %arg5: memref<64x16xf32, #tpu.memory_space<vmem>>, %arg6: memref<32x64xf32, #tpu.memory_space<vmem>>, %arg7: memref<32x1xf32, #tpu.memory_space<vmem>>, %arg8: memref<32x1xf32, #tpu.memory_space<vmem>>, %arg9: memref<32x16xf32, #tpu.memory_space<vmem>>) attributes {dimension_semantics = [#tpu.dimension_semantics<parallel>], iteration_bounds = array<i64: 1>, scalar_prefetch = 0 : i64, scratch_operands = 0 : i64, tpu.core_type = #tpu.core_type<tc>, window_params = [{transform_indices = @transform_0, window_bounds = array<i64: 40, 16>}, {pipeline_mode = #tpu.pipeline_mode<synchronous>, transform_indices = @transform_1, window_bounds = array<i64: 8, 40>}, {pipeline_mode = #tpu.pipeline_mode<synchronous>, transform_indices = @transform_2, window_bounds = array<i64: 64, 8>}, {pipeline_mode = #tpu.pipeline_mode<synchronous>, transform_indices = @transform_3, window_bounds = array<i64: 16, 16>}, {pipeline_mode = #tpu.pipeline_mode<synchronous>, transform_indices = @transform_4, window_bounds = array<i64: 64, 16>}, {pipeline_mode = #tpu.pipeline_mode<synchronous>, transform_indices = @transform_5, window_bounds = array<i64: 32, 64>}, {pipeline_mode = #tpu.pipeline_mode<synchronous>, transform_indices = @transform_6, window_bounds = array<i64: 32, 1>}, {pipeline_mode = #tpu.pipeline_mode<synchronous>, transform_indices = @transform_7, window_bounds = array<i64: 32, 1>}, {transform_indices = @transform_8, window_bounds = array<i64: 32, 16>}]} {
    %c0 = arith.constant 0 : index
    %c0_0 = arith.constant 0 : index
    %0 = vector.load %arg1[%c0, %c0_0] : memref<40x16xf32, #tpu.memory_space<vmem>>, vector<40x16xf32>
    %c0_1 = arith.constant 0 : index
    %c0_2 = arith.constant 0 : index
    %1 = vector.load %arg2[%c0_1, %c0_2] : memref<8x40xf32, #tpu.memory_space<vmem>>, vector<8x40xf32>
    %cst = arith.constant dense<0.000000e+00> : vector<8x16xf32>
    %2 = tpu.matmul %1, %0, %cst {dimension_numbers = #tpu.dot_dimension_numbers<[1], [0], [0], [1], [0, 0, 1, 1], [], []>} : vector<8x40xf32>, vector<40x16xf32>, vector<8x16xf32> -> vector<8x16xf32>
    %cst_3 = arith.constant 0.000000e+00 : f32
    %3 = vector.broadcast %cst_3 : f32 to vector<8x16xf32>
    %4 = arith.maximumf %2, %3 : vector<8x16xf32>
    %c0_4 = arith.constant 0 : index
    %c0_5 = arith.constant 0 : index
    %5 = vector.load %arg3[%c0_4, %c0_5] : memref<64x8xf32, #tpu.memory_space<vmem>>, vector<64x8xf32>
    %cst_6 = arith.constant dense<0.000000e+00> : vector<64x16xf32>
    %6 = tpu.matmul %5, %4, %cst_6 {dimension_numbers = #tpu.dot_dimension_numbers<[1], [0], [0], [1], [0, 0, 1, 1], [], []>} : vector<64x8xf32>, vector<8x16xf32>, vector<64x16xf32> -> vector<64x16xf32>
    %cst_7 = arith.constant 0.000000e+00 : f32
    %7 = vector.broadcast %cst_7 : f32 to vector<64x16xf32>
    %8 = arith.maximumf %6, %7 : vector<64x16xf32>
    %c0_8 = arith.constant 0 : index
    %c0_9 = arith.constant 0 : index
    %9 = vector.load %arg4[%c0_8, %c0_9] : memref<16x16xf32, #tpu.memory_space<vmem>>, vector<16x16xf32>
    %cst_10 = arith.constant dense<0.000000e+00> : vector<64x16xf32>
    %10 = tpu.matmul %8, %9, %cst_10 {dimension_numbers = #tpu.dot_dimension_numbers<[1], [0], [0], [1], [0, 0, 1, 1], [], []>} : vector<64x16xf32>, vector<16x16xf32>, vector<64x16xf32> -> vector<64x16xf32>
    %c0_11 = arith.constant 0 : index
    %c0_12 = arith.constant 0 : index
    %11 = vector.load %arg5[%c0_11, %c0_12] : memref<64x16xf32, #tpu.memory_space<vmem>>, vector<64x16xf32>
    %12 = arith.mulf %10, %11 : vector<64x16xf32>
    %c0_13 = arith.constant 0 : index
    %c0_14 = arith.constant 0 : index
    %13 = vector.load %arg6[%c0_13, %c0_14] : memref<32x64xf32, #tpu.memory_space<vmem>>, vector<32x64xf32>
    %cst_15 = arith.constant dense<0.000000e+00> : vector<32x16xf32>
    %14 = tpu.matmul %13, %12, %cst_15 {dimension_numbers = #tpu.dot_dimension_numbers<[1], [0], [0], [1], [0, 0, 1, 1], [], []>} : vector<32x64xf32>, vector<64x16xf32>, vector<32x16xf32> -> vector<32x16xf32>
    %cst_16 = arith.constant 0.000000e+00 : f32
    %15 = vector.broadcast %cst_16 : f32 to vector<32x16xf32>
    %16 = arith.maximumf %14, %15 : vector<32x16xf32>
    %c0_17 = arith.constant 0 : index
    %c0_18 = arith.constant 0 : index
    %17 = vector.load %arg7[%c0_17, %c0_18] : memref<32x1xf32, #tpu.memory_space<vmem>>, vector<32x1xf32>
    %18 = vector.broadcast %17 : vector<32x1xf32> to vector<32x16xf32>
    %19 = arith.mulf %16, %18 : vector<32x16xf32>
    %c0_19 = arith.constant 0 : index
    %c0_20 = arith.constant 0 : index
    %20 = vector.load %arg8[%c0_19, %c0_20] : memref<32x1xf32, #tpu.memory_space<vmem>>, vector<32x1xf32>
    %21 = vector.broadcast %20 : vector<32x1xf32> to vector<32x16xf32>
    %22 = arith.addf %19, %21 : vector<32x16xf32>
    %c0_21 = arith.constant 0 : index
    %c0_22 = arith.constant 0 : index
    %23 = vector.load %arg9[%c0_21, %c0_22] : memref<32x16xf32, #tpu.memory_space<vmem>>, vector<32x16xf32>
    tpu.vector_store %arg9[%c0_21, %c0_22], %22 {strides = array<i32>} : memref<32x16xf32, #tpu.memory_space<vmem>>, vector<32x16xf32>,
    return
  }
  func.func @transform_0(%arg0: i32) -> (i32, i32) {
    %c0_i32 = arith.constant 0 : i32
    %c0_i32_0 = arith.constant 0 : i32
    return %c0_i32, %arg0 : i32, i32
  }
  func.func @transform_1(%arg0: i32) -> (i32, i32) {
    %c0_i32 = arith.constant 0 : i32
    %c0_i32_0 = arith.constant 0 : i32
    %c0_i32_1 = arith.constant 0 : i32
    return %c0_i32, %c0_i32_0 : i32, i32
  }
  func.func @transform_2(%arg0: i32) -> (i32, i32) {
    %c0_i32 = arith.constant 0 : i32
    %c0_i32_0 = arith.constant 0 : i32
    %c0_i32_1 = arith.constant 0 : i32
    return %c0_i32, %c0_i32_0 : i32, i32
  }
  func.func @transform_3(%arg0: i32) -> (i32, i32) {
    %c0_i32 = arith.constant 0 : i32
    %c0_i32_0 = arith.constant 0 : i32
    %c0_i32_1 = arith.constant 0 : i32
    return %c0_i32, %c0_i32_0 : i32, i32
  }
  func.func @transform_4(%arg0: i32) -> (i32, i32) {
    %c0_i32 = arith.constant 0 : i32
    %c0_i32_0 = arith.constant 0 : i32
    %c0_i32_1 = arith.constant 0 : i32
    return %c0_i32, %c0_i32_0 : i32, i32
  }
  func.func @transform_5(%arg0: i32) -> (i32, i32) {
    %c0_i32 = arith.constant 0 : i32
    %c0_i32_0 = arith.constant 0 : i32
    %c0_i32_1 = arith.constant 0 : i32
    return %c0_i32, %c0_i32_0 : i32, i32
  }
  func.func @transform_6(%arg0: i32) -> (i32, i32) {
    %c0_i32 = arith.constant 0 : i32
    %c0_i32_0 = arith.constant 0 : i32
    %c0_i32_1 = arith.constant 0 : i32
    return %c0_i32, %c0_i32_0 : i32, i32
  }
  func.func @transform_7(%arg0: i32) -> (i32, i32) {
    %c0_i32 = arith.constant 0 : i32
    %c0_i32_0 = arith.constant 0 : i32
    %c0_i32_1 = arith.constant 0 : i32
    return %c0_i32, %c0_i32_0 : i32, i32
  }
  func.func @transform_8(%arg0: i32) -> (i32, i32) {
    %c0_i32 = arith.constant 0 : i32
    %c0_i32_0 = arith.constant 0 : i32
    return %c0_i32, %arg0 : i32, i32
  }
}

</mosaic_0001>

<llo_original>
// kernel: tpu_custom_call.1
$region0: #{tpu_custom_call.1}
  #allocation0 [shape = 'u32[]', space=smem, size = 0x4, offset = 0x4, fixed_abs, tag = 'smem constant byte address 0x4 - core index']
  #allocation1 [shape = 'u32[72,128]{1,0:T(1,128)}', space=vmem, size = 0x9000, scoped, tag = 'internal scratch']
  %s0 = inlined_call_operand.vmem [shape: f32[40,16], index: 0, kind: input, shape index: {}]
  %s1 = inlined_call_operand.vmem [shape: f32[8,40], index: 1, kind: input, shape index: {}]
  %s2 = inlined_call_operand.vmem [shape: f32[64,8], index: 2, kind: input, shape index: {}]
  %s3 = inlined_call_operand.vmem [shape: f32[16,16], index: 3, kind: input, shape index: {}]
  %s4 = inlined_call_operand.vmem [shape: f32[64,16], index: 4, kind: input, shape index: {}]
  %s5 = inlined_call_operand.vmem [shape: f32[32,64], index: 5, kind: input, shape index: {}]
  %s6 = inlined_call_operand.vmem [shape: f32[32,1], index: 6, kind: input, shape index: {}]
  %s7 = inlined_call_operand.vmem [shape: f32[32,1], index: 7, kind: input, shape index: {}]
  %s8 = inlined_call_operand.vmem [shape: f32[32,16], index: 8, kind: output, shape index: {}]
  %s9 = sld [smem:[#allocation0]]
  $region42: #{tpu_custom_call.1} parent=0
    _
  %s11 = ssub.s32 1, %s9
  %s12 = scalar_select 0, %s11, %s9
  // Predicated region
  $region2: #{tpu_custom_call.1} parent=0 // pred_check
    _
  $region3: #{tpu_custom_call.1} parent=0 // pred_check_branch
    %14 = sbr.rel (0) target = $region5
  $region4: #{tpu_custom_call.1} parent=0 // pred_region
    _
  $region5: #{tpu_custom_call.1} parent=0 // pred_fallthru
    _
  // Predicated region
  $region6: #{tpu_custom_call.1} parent=0 // pred_check
    _
  $region7: #{tpu_custom_call.1} parent=0 // pred_check_branch
    %16 = sbr.rel (0) target = $region9
  $region8: #{tpu_custom_call.1} parent=0 // pred_region
    _
  $region9: #{tpu_custom_call.1} parent=0 // pred_fallthru
    _
  // Predicated region
  $region10: #{tpu_custom_call.1} parent=0 // pred_check
    _
  $region11: #{tpu_custom_call.1} parent=0 // pred_check_branch
    %18 = sbr.rel (0) target = $region13
  $region12: #{tpu_custom_call.1} parent=0 // pred_region
    _
  $region13: #{tpu_custom_call.1} parent=0 // pred_fallthru
    _
  // Predicated region
  $region14: #{tpu_custom_call.1} parent=0 // pred_check
    _
  $region15: #{tpu_custom_call.1} parent=0 // pred_check_branch
    %20 = sbr.rel (0) target = $region17
  $region16: #{tpu_custom_call.1} parent=0 // pred_region
    _
  $region17: #{tpu_custom_call.1} parent=0 // pred_fallthru
    _
  // Predicated region
  $region18: #{tpu_custom_call.1} parent=0 // pred_check
    _
  $region19: #{tpu_custom_call.1} parent=0 // pred_check_branch
    %22 = sbr.rel (0) target = $region21
  $region20: #{tpu_custom_call.1} parent=0 // pred_region
    _
  $region21: #{tpu_custom_call.1} parent=0 // pred_fallthru
    _
  // Predicated region
  $region22: #{tpu_custom_call.1} parent=0 // pred_check
    _
  $region23: #{tpu_custom_call.1} parent=0 // pred_check_branch
    %24 = sbr.rel (0) target = $region25
  $region24: #{tpu_custom_call.1} parent=0 // pred_region
    _
  $region25: #{tpu_custom_call.1} parent=0 // pred_fallthru
    _
  // Predicated region
  $region26: #{tpu_custom_call.1} parent=0 // pred_check
    _
  $region27: #{tpu_custom_call.1} parent=0 // pred_check_branch
    %26 = sbr.rel (0) target = $region29
  $region28: #{tpu_custom_call.1} parent=0 // pred_region
    _
  $region29: #{tpu_custom_call.1} parent=0 // pred_fallthru
    _
  // Predicated region
  $region30: #{tpu_custom_call.1} parent=0 // pred_check
    _
  $region31: #{tpu_custom_call.1} parent=0 // pred_check_branch
    %28 = sbr.rel (0) target = $region33
  $region32: #{tpu_custom_call.1} parent=0 // pred_region
    _
  $region33: #{tpu_custom_call.1} parent=0 // pred_fallthru
    _
  %v29 = vld [vmem:[%s0] sm:$0xff]
  %v30 = vld [vmem:[%s0 + $0x8] sm:$0xff]
  %v31 = vld [vmem:[%s0 + $0x10] sm:$0xff]
  %v32 = vld [vmem:[%s0 + $0x18] sm:$0xff]
  %v33 = vld [vmem:[%s0 + $0x20] sm:$0xff]
  %v34 = vld [vmem:[%s1] sm:$0xff]
  %vm35 = vcmask 326656
  %v37 = vsel %vm35, %v34, 0
  %39 = vmatpush.msra.mxu0 0.0
  %40 = vmatpush.msra.mxu0 0.0
  %41 = vmatpush.msra.mxu0 0.0
  %42 = vmatpush.msra.mxu0 0.0
  %43 = vmatpush.msra.mxu0 0.0
  %44 = vmatpush.msra.mxu0 0.0
  %45 = vmatpush.msra.mxu0 0.0
  %46 = vmatpush.msra.mxu0 0.0
  %47 = vmatpush.msra.mxu0 0.0
  %48 = vmatpush.msra.mxu0 0.0
  %49 = vmatpush.msra.mxu0 0.0
  %50 = vmatpush.msra.mxu0 %v33
  %51 = vmatpush.msra.mxu0 %v32
  %52 = vmatpush.msra.mxu0 %v31
  %53 = vmatpush.msra.mxu0 %v30
  %54 = vmatpush.msra.mxu0 %v29
  %55 = vmatmul.f32.gmra.mxu0 %v37
  %v56 = vpop.f32.mrf.mxu0
  %v57 = vadd.f32 0.0, %v56
  %58 = vdwg.mxu0
  %v59 = vmax.f32 %v57, 0.0
  %v60 = vld [vmem:[%s2] sm:$0xff]
  %v61 = vld [vmem:[%s2 + $0x8] sm:$0xff]
  %v62 = vld [vmem:[%s2 + $0x10] sm:$0xff]
  %v63 = vld [vmem:[%s2 + $0x18] sm:$0xff]
  %v64 = vld [vmem:[%s2 + $0x20] sm:$0xff]
  %v65 = vld [vmem:[%s2 + $0x28] sm:$0xff]
  %v66 = vld [vmem:[%s2 + $0x30] sm:$0xff]
  %v67 = vld [vmem:[%s2 + $0x38] sm:$0xff]
  %vm68 = vcmask 64512
  %v70 = vsel %vm68, %v60, 0
  %v73 = vsel %vm68, %v61, 0
  %v76 = vsel %vm68, %v62, 0
  %v79 = vsel %vm68, %v63, 0
  %v82 = vsel %vm68, %v64, 0
  %v85 = vsel %vm68, %v65, 0
  %v88 = vsel %vm68, %v66, 0
  %v91 = vsel %vm68, %v67, 0
  %93 = vmatpush.msra.mxu0 0.0
  %94 = vmatpush.msra.mxu0 0.0
  %95 = vmatpush.msra.mxu0 0.0
  %96 = vmatpush.msra.mxu0 0.0
  %97 = vmatpush.msra.mxu0 0.0
  %98 = vmatpush.msra.mxu0 0.0
  %99 = vmatpush.msra.mxu0 0.0
  %100 = vmatpush.msra.mxu0 0.0
  %101 = vmatpush.msra.mxu0 0.0
  %102 = vmatpush.msra.mxu0 0.0
  %103 = vmatpush.msra.mxu0 0.0
  %104 = vmatpush.msra.mxu0 0.0
  %105 = vmatpush.msra.mxu0 0.0
  %106 = vmatpush.msra.mxu0 0.0
  %107 = vmatpush.msra.mxu0 0.0
  %108 = vmatpush.msra.mxu0 %v59
  %109 = vmatmul.f32.gmra.mxu0 %v70
  %v110 = vpop.f32.mrf.mxu0
  %v111 = vadd.f32 0.0, %v110
  %112 = vmatmul.f32.gmra.mxu0 %v73
  %v113 = vpop.f32.mrf.mxu0
  %v114 = vadd.f32 0.0, %v113
  %115 = vmatmul.f32.gmra.mxu0 %v76
  %v116 = vpop.f32.mrf.mxu0
  %v117 = vadd.f32 0.0, %v116
  %118 = vmatmul.f32.gmra.mxu0 %v79
  %v119 = vpop.f32.mrf.mxu0
  %v120 = vadd.f32 0.0, %v119
  %121 = vmatmul.f32.gmra.mxu0 %v82
  %v122 = vpop.f32.mrf.mxu0
  %v123 = vadd.f32 0.0, %v122
  %124 = vmatmul.f32.gmra.mxu0 %v85
  %v125 = vpop.f32.mrf.mxu0
  %v126 = vadd.f32 0.0, %v125
  %127 = vmatmul.f32.gmra.mxu0 %v88
  %v128 = vpop.f32.mrf.mxu0
  %v129 = vadd.f32 0.0, %v128
  %130 = vmatmul.f32.gmra.mxu0 %v91
  %v131 = vpop.f32.mrf.mxu0
  %v132 = vadd.f32 0.0, %v131
  %133 = vdwg.mxu0
  %v134 = vmax.f32 %v111, 0.0
  %v135 = vmax.f32 %v114, 0.0
  %v136 = vmax.f32 %v117, 0.0
  %v137 = vmax.f32 %v120, 0.0
  %v138 = vmax.f32 %v123, 0.0
  %v139 = vmax.f32 %v126, 0.0
  %v140 = vmax.f32 %v129, 0.0
  %v141 = vmax.f32 %v132, 0.0
  %v142 = vld [vmem:[%s3] sm:$0xff]
  %v143 = vld [vmem:[%s3 + $0x8] sm:$0xff]
  %vm144 = vcmask 130048
  %v146 = vsel %vm144, %v134, 0
  %v149 = vsel %vm144, %v135, 0
  %v152 = vsel %vm144, %v136, 0
  %v155 = vsel %vm144, %v137, 0
  %v158 = vsel %vm144, %v138, 0
  %v161 = vsel %vm144, %v139, 0
  %v164 = vsel %vm144, %v140, 0
  %v167 = vsel %vm144, %v141, 0
  %169 = vmatpush.msra.mxu0 0.0
  %170 = vmatpush.msra.mxu0 0.0
  %171 = vmatpush.msra.mxu0 0.0
  %172 = vmatpush.msra.mxu0 0.0
  %173 = vmatpush.msra.mxu0 0.0
  %174 = vmatpush.msra.mxu0 0.0
  %175 = vmatpush.msra.mxu0 0.0
  %176 = vmatpush.msra.mxu0 0.0
  %177 = vmatpush.msra.mxu0 0.0
  %178 = vmatpush.msra.mxu0 0.0
  %179 = vmatpush.msra.mxu0 0.0
  %180 = vmatpush.msra.mxu0 0.0
  %181 = vmatpush.msra.mxu0 0.0
  %182 = vmatpush.msra.mxu0 0.0
  %183 = vmatpush.msra.mxu0 %v143
  %184 = vmatpush.msra.mxu0 %v142
  %185 = vmatmul.f32.gmra.mxu0 %v146
  %v186 = vpop.f32.mrf.mxu0
  %v187 = vadd.f32 0.0, %v186
  %188 = vmatmul.f32.gmra.mxu0 %v149
  %v189 = vpop.f32.mrf.mxu0
  %v190 = vadd.f32 0.0, %v189
  %191 = vmatmul.f32.gmra.mxu0 %v152
  %v192 = vpop.f32.mrf.mxu0
  %v193 = vadd.f32 0.0, %v192
  %194 = vmatmul.f32.gmra.mxu0 %v155
  %v195 = vpop.f32.mrf.mxu0
  %v196 = vadd.f32 0.0, %v195
  %197 = vmatmul.f32.gmra.mxu0 %v158
  %v198 = vpop.f32.mrf.mxu0
  %v199 = vadd.f32 0.0, %v198
  %200 = vmatmul.f32.gmra.mxu0 %v161
  %v201 = vpop.f32.mrf.mxu0
  %v202 = vadd.f32 0.0, %v201
  %203 = vmatmul.f32.gmra.mxu0 %v164
  %v204 = vpop.f32.mrf.mxu0
  %v205 = vadd.f32 0.0, %v204
  %206 = vmatmul.f32.gmra.mxu0 %v167
  %v207 = vpop.f32.mrf.mxu0
  %v208 = vadd.f32 0.0, %v207
  %209 = vdwg.mxu0
  %v210 = vld [vmem:[%s4] sm:$0xff]
  %v211 = vld [vmem:[%s4 + $0x8] sm:$0xff]
  %v212 = vld [vmem:[%s4 + $0x10] sm:$0xff]
  %v213 = vld [vmem:[%s4 + $0x18] sm:$0xff]
  %v214 = vld [vmem:[%s4 + $0x20] sm:$0xff]
  %v215 = vld [vmem:[%s4 + $0x28] sm:$0xff]
  %v216 = vld [vmem:[%s4 + $0x30] sm:$0xff]
  %v217 = vld [vmem:[%s4 + $0x38] sm:$0xff]
  %v218 = vmul.f32 %v187, %v210
  %v219 = vmul.f32 %v190, %v211
  %v220 = vmul.f32 %v193, %v212
  %v221 = vmul.f32 %v196, %v213
  %v222 = vmul.f32 %v199, %v214
  %v223 = vmul.f32 %v202, %v215
  %v224 = vmul.f32 %v205, %v216
  %v225 = vmul.f32 %v208, %v217
  %v226 = vld [vmem:[%s5] sm:$0xff]
  %v227 = vld [vmem:[%s5 + $0x8] sm:$0xff]
  %v228 = vld [vmem:[%s5 + $0x10] sm:$0xff]
  %v229 = vld [vmem:[%s5 + $0x18] sm:$0xff]
  %vm230 = vcmask 523264
  %v232 = vsel %vm230, %v226, 0
  %v235 = vsel %vm230, %v227, 0
  %v238 = vsel %vm230, %v228, 0
  %v241 = vsel %vm230, %v229, 0
  %243 = vmatpush.msra.mxu0 0.0
  %244 = vmatpush.msra.mxu0 0.0
  %245 = vmatpush.msra.mxu0 0.0
  %246 = vmatpush.msra.mxu0 0.0
  %247 = vmatpush.msra.mxu0 0.0
  %248 = vmatpush.msra.mxu0 0.0
  %249 = vmatpush.msra.mxu0 0.0
  %250 = vmatpush.msra.mxu0 0.0
  %251 = vmatpush.msra.mxu0 %v225
  %252 = vmatpush.msra.mxu0 %v224
  %253 = vmatpush.msra.mxu0 %v223
  %254 = vmatpush.msra.mxu0 %v222
  %255 = vmatpush.msra.mxu0 %v221
  %256 = vmatpush.msra.mxu0 %v220
  %257 = vmatpush.msra.mxu0 %v219
  %258 = vmatpush.msra.mxu0 %v218
  %259 = vmatmul.f32.gmra.mxu0 %v232
  %v260 = vpop.f32.mrf.mxu0
  %v261 = vadd.f32 0.0, %v260
  %262 = vmatmul.f32.gmra.mxu0 %v235
  %v263 = vpop.f32.mrf.mxu0
  %v264 = vadd.f32 0.0, %v263
  %265 = vmatmul.f32.gmra.mxu0 %v238
  %v266 = vpop.f32.mrf.mxu0
  %v267 = vadd.f32 0.0, %v266
  %268 = vmatmul.f32.gmra.mxu0 %v241
  %v269 = vpop.f32.mrf.mxu0
  %v270 = vadd.f32 0.0, %v269
  %271 = vdwg.mxu0
  %v272 = vmax.f32 %v261, 0.0
  %v273 = vmax.f32 %v264, 0.0
  %v274 = vmax.f32 %v267, 0.0
  %v275 = vmax.f32 %v270, 0.0
  %v276 = vld [vmem:[%s6] sm:$0xff]
  %v277 = vld [vmem:[%s6 + $0x8] sm:$0xff]
  %v278 = vld [vmem:[%s6 + $0x10] sm:$0xff]
  %v279 = vld [vmem:[%s6 + $0x18] sm:$0xff]
  %281 = vset.pattern.permute.xlu0 0
  %282 = vperm.xlu0 %281, %v276
  %v283 = vpop.permute.xlu0 %282
  %286 = vset.pattern.permute.xlu0 0
  %287 = vperm.xlu0 %286, %v277
  %v288 = vpop.permute.xlu0 %287
  %291 = vset.pattern.permute.xlu0 0
  %292 = vperm.xlu0 %291, %v278
  %v293 = vpop.permute.xlu0 %292
  %296 = vset.pattern.permute.xlu0 0
  %297 = vperm.xlu0 %296, %v279
  %v298 = vpop.permute.xlu0 %297
  %v300 = vmul.f32 %v272, %v283
  %v301 = vmul.f32 %v273, %v288
  %v302 = vmul.f32 %v274, %v293
  %v303 = vmul.f32 %v275, %v298
  %v304 = vld [vmem:[%s7] sm:$0xff]
  %v305 = vld [vmem:[%s7 + $0x8] sm:$0xff]
  %v306 = vld [vmem:[%s7 + $0x10] sm:$0xff]
  %v307 = vld [vmem:[%s7 + $0x18] sm:$0xff]
  %309 = vset.pattern.permute.xlu0 0
  %310 = vperm.xlu0 %309, %v304
  %v311 = vpop.permute.xlu0 %310
  %314 = vset.pattern.permute.xlu0 0
  %315 = vperm.xlu0 %314, %v305
  %v316 = vpop.permute.xlu0 %315
  %319 = vset.pattern.permute.xlu0 0
  %320 = vperm.xlu0 %319, %v306
  %v321 = vpop.permute.xlu0 %320
  %324 = vset.pattern.permute.xlu0 0
  %325 = vperm.xlu0 %324, %v307
  %v326 = vpop.permute.xlu0 %325
  %v328 = vadd.f32 %v300, %v311
  %v329 = vadd.f32 %v301, %v316
  %v330 = vadd.f32 %v302, %v321
  %v331 = vadd.f32 %v303, %v326
  %332 = vst.msk [vmem:[%s8] sm:$0xff] %vm144, %v328
  %333 = vst.msk [vmem:[%s8 + $0x8] sm:$0xff] %vm144, %v329
  %334 = vst.msk [vmem:[%s8 + $0x10] sm:$0xff] %vm144, %v330
  %335 = vst.msk [vmem:[%s8 + $0x18] sm:$0xff] %vm144, %v331
  // Predicated region
  $region34: #{tpu_custom_call.1} parent=0 // pred_check
    _
  $region35: #{tpu_custom_call.1} parent=0 // pred_check_branch
    %337 = sbr.rel (0) target = $region37
  $region36: #{tpu_custom_call.1} parent=0 // pred_region
    _
  $region37: #{tpu_custom_call.1} parent=0 // pred_fallthru
    _
  // Predicated region
  $region38: #{tpu_custom_call.1} parent=0 // pred_check
    _
  $region39: #{tpu_custom_call.1} parent=0 // pred_check_branch
    %339 = sbr.rel (0) target = $region41
  $region40: #{tpu_custom_call.1} parent=0 // pred_region
    _
  $region41: #{tpu_custom_call.1} parent=0 // pred_fallthru
    _

</llo_original>
